<compile_context>
chip_gen: v7x
topology: tpu7x:2x2x1
jax: 0.10.0
libtpu: 0.0.40
codegen_flags: <defaults>
</compile_context>

<pallas_src>
import functools
import math

import jax
import jax.numpy as jnp
from jax.experimental import pallas as pl
from jax.experimental.pallas import tpu as pltpu

_MASK_VALUE = -1e30  # large-negative additive bias (exp underflows to exactly 0)


def _mha_kernel(x_ref, xa_ref, wq_ref, wk_ref, wv_ref, wot_ref, o_ref,
                acc_ref, k_scr, v_scr, *opt_scratch,
                causal: bool, scale: float, compute_dtype):
    # x_ref  : (1, block_q, D)        query-side block (compute_dtype)
    # xa_ref : (1, S, D)              key/value-side input (compute_dtype)
    # w*_ref : (n_head, d_head, D)    per-head weight slabs, VMEM-resident
    # o_ref  : (1, block_q, D)
    # acc_ref: (block_q, D) f32       output accumulator over heads
    # k_scr/v_scr: (n_head, S, d_head) compute_dtype   cached K/V projections
    # opt_scratch[0] (causal only): (block_q, S) f32 additive mask bias
    qi = pl.program_id(1)
    h = pl.program_id(2)
    n_head = pl.num_programs(2)
    block_q = x_ref.shape[1]
    S = xa_ref.shape[1]

    # Contract the last axis of both operands: A @ B.T without a transpose op.
    tdims = (((1,), (1,)), ((), ()))

    # ---- per-(batch, head) K/V projection: compute once, reuse for all qi ----
    @pl.when(qi == 0)
    def _project_kv():
        xa = xa_ref[0]                                              # (S, D)
        k = jax.lax.dot_general(xa, wk_ref[h], tdims,
                                preferred_element_type=jnp.float32)  # (S, dh)
        v = jax.lax.dot_general(xa, wv_ref[h], tdims,
                                preferred_element_type=jnp.float32)  # (S, dh)
        k_scr[h] = k.astype(compute_dtype)
        v_scr[h] = v.astype(compute_dtype)

    # ---- per-(batch, q-block) init: zero accumulator, build causal bias ----
    @pl.when(h == 0)
    def _init():
        acc_ref[...] = jnp.zeros_like(acc_ref)
        if causal:
            bias_ref = opt_scratch[0]
            q0 = qi * block_q                   # global query offset of block
            row = q0 + jax.lax.broadcasted_iota(jnp.int32, (block_q, S), 0)
            col = jax.lax.broadcasted_iota(jnp.int32, (block_q, S), 1)
            bias_ref[...] = jnp.where(col <= row, 0.0,
                                      _MASK_VALUE).astype(jnp.float32)

    x = x_ref[0]                                                    # (bq, D)
    q = jax.lax.dot_general(x, wq_ref[h], tdims,
                            preferred_element_type=jnp.float32)     # (bq, dh)
    # Fold softmax scale into q (bq*dh elements, not bq*S scores).
    qc = (q * scale).astype(compute_dtype)

    kc = k_scr[h]                                                   # (S, dh)
    vc = v_scr[h]                                                   # (S, dh)

    s = jax.lax.dot_general(qc, kc, tdims,
                            preferred_element_type=jnp.float32)     # (bq, S)
    if causal:
        s = s + opt_scratch[0][...]

    # Numerically-stable softmax; normalization deferred to the PV output.
    m = jnp.max(s, axis=-1, keepdims=True)
    p = jnp.exp(s - m)
    l = jnp.sum(p, axis=-1, keepdims=True)

    pv = jnp.dot(p.astype(compute_dtype), vc,
                 preferred_element_type=jnp.float32)                 # (bq, dh)
    pv = pv * pl.reciprocal(l, approx=True)   # EUP reciprocal on (bq, 1)

    # Output projection for this head, accumulated over heads in f32.
    acc_ref[...] += jnp.dot(pv.astype(compute_dtype), wot_ref[h],
                            preferred_element_type=jnp.float32)      # (bq, D)

    @pl.when(h == n_head - 1)
    def _finalize():
        o_ref[0] = acc_ref[...].astype(o_ref.dtype)


def _pick_block_q(T: int) -> int:
    # Prefer MXU/lane-friendly multiples of 128; otherwise full T
    # (a full-extent block is always layout-legal).
    for c in (512, 256, 128):
        if T % c == 0:
            return c
    return T


def multi_head_attention(x, wq, wk, wv, wo, n_head, xa=None, mask=None, *,
                         compute_dtype=jnp.bfloat16, block_q=None,
                         vmem_limit_bytes=48 * 1024 * 1024):
    """Pallas TPU implementation of MultiHeadAttention.forward.

    x    : (B, T, D) float32
    xa   : (B, S, D) or None (cross-attention source; None -> self-attention)
    mask : if not None, attention is causal (the PyTorch module only checks
           whether `mask` was supplied)
    w*   : (D, D) PyTorch-layout weights (out_features, in_features)
    """
    if xa is None:
        xa = x
    causal = mask is not None

    B, T, D = x.shape
    S = xa.shape[1]
    assert D % n_head == 0, "n_head does not evenly divide n_state"
    d_head = D // n_head
    scale = 1.0 / math.sqrt(d_head)

    if block_q is None:
        block_q = _pick_block_q(T)
    assert T % block_q == 0, "block_q must divide T"
    num_q = T // block_q

    cdt = compute_dtype
    xc = x.astype(cdt)
    xac = xa.astype(cdt)
    # PyTorch layout is (out_features, in_features).  Group the output dim by
    # head -> (n_head, d_head, D); the kernel indexes the leading axis (cheap,
    # no lane/sublane relayout).  Wo is pre-transposed ONCE here so the kernel
    # never transposes a weight.
    wq3 = wq.astype(cdt).reshape(n_head, d_head, D)
    wk3 = wk.astype(cdt).reshape(n_head, d_head, D)
    wv3 = wv.astype(cdt).reshape(n_head, d_head, D)
    wot3 = wo.T.astype(cdt).reshape(n_head, d_head, D)

    kernel = functools.partial(_mha_kernel, causal=causal, scale=scale,
                               compute_dtype=cdt)

    scratch = [
        pltpu.VMEM((block_q, D), jnp.float32),    # head-sum accumulator
        pltpu.VMEM((n_head, S, d_head), cdt),     # cached K per head
        pltpu.VMEM((n_head, S, d_head), cdt),     # cached V per head
    ]
    if causal:
        scratch.append(pltpu.VMEM((block_q, S), jnp.float32))  # mask bias cache

    w_spec = pl.BlockSpec((n_head, d_head, D), lambda b, qi, h: (0, 0, 0))

    # The K/V cache is filled at qi == 0, so the q-block axis must not be
    # split across cores when there is more than one q block; the batch axis
    # stays "parallel" (each core re-fills its own cache at its first qi).
    qi_sem = "arbitrary" if num_q > 1 else "parallel"

    return pl.pallas_call(
        kernel,
        out_shape=jax.ShapeDtypeStruct((B, T, D), x.dtype),
        grid_spec=pltpu.PrefetchScalarGridSpec(
            num_scalar_prefetch=0,
            grid=(B, num_q, n_head),   # head (reduction) axis last
            in_specs=[
                pl.BlockSpec((1, block_q, D), lambda b, qi, h: (b, qi, 0)),  # x
                pl.BlockSpec((1, S, D), lambda b, qi, h: (b, 0, 0)),         # xa
                w_spec, w_spec, w_spec, w_spec,                              # weights
            ],
            out_specs=pl.BlockSpec((1, block_q, D), lambda b, qi, h: (b, qi, 0)),
            scratch_shapes=scratch,
        ),
        compiler_params=pltpu.CompilerParams(
            dimension_semantics=("parallel", qi_sem, "arbitrary"),
            vmem_limit_bytes=vmem_limit_bytes,
        ),
    )(xc, xac, wq3, wk3, wv3, wot3)


def _reference(x, wq, wk, wv, wo, n_head, xa=None, mask=None):
    """Pure-JAX (f32) reference mirroring the PyTorch forward."""
    if xa is None:
        xa = x
    B, T, D = x.shape
    S = xa.shape[1]
    d_head = D // n_head
    q = x @ wq.T
    k = xa @ wk.T
    v = xa @ wv.T
    q = q.reshape(B, T, n_head, d_head).transpose(0, 2, 1, 3)
    k = k.reshape(B, S, n_head, d_head).transpose(0, 2, 1, 3)
    v = v.reshape(B, S, n_head, d_head).transpose(0, 2, 1, 3)
    s = jnp.einsum("bhtd,bhsd->bhts", q, k) / math.sqrt(d_head)
    if mask is not None:
        causal_mask = jnp.tril(jnp.ones((T, S), dtype=bool))
        s = jnp.where(causal_mask, s, -jnp.inf)
    p = jax.nn.softmax(s, axis=-1)
    wv_ = jnp.einsum("bhts,bhsd->bhtd", p, v)
    wv_ = wv_.transpose(0, 2, 1, 3).reshape(B, T, D)
    return wv_ @ wo.T


if __name__ == "__main__":
    B, n_state, n_head = 2, 128, 4
    T = 16

    key = jax.random.PRNGKey(0)
    kx, kxa, kq, kk, kv, ko = jax.random.split(key, 6)

    # Deterministic nn.Linear-style init: U(-1/sqrt(in), 1/sqrt(in)), (out, in)
    bound = 1.0 / math.sqrt(n_state)
    init = lambda k: jax.random.uniform(
        k, (n_state, n_state), minval=-bound, maxval=bound, dtype=jnp.float32)
    wq, wk, wv, wo = init(kq), init(kk), init(kv), init(ko)

    x = jax.random.normal(kx, (B, T, n_state), dtype=jnp.float32)

    # 1) self-attention, no mask, bf16 MXU path (default)
    out = jax.block_until_ready(multi_head_attention(x, wq, wk, wv, wo, n_head))
    ref = _reference(x, wq, wk, wv, wo, n_head)
    assert jnp.allclose(out, ref, atol=1e-1, rtol=1e-1), \
        "mismatch vs reference (self-attn, bf16)"

    # 2) causal self-attention, f32 compute, two query blocks
    #    (exercises the head accumulator, the per-head K/V cache reuse across
    #     q blocks, and the q-block-dependent causal mask offset)
    out_c = jax.block_until_ready(
        multi_head_attention(x, wq, wk, wv, wo, n_head, mask=True,
                             compute_dtype=jnp.float32, block_q=8))
    ref_c = _reference(x, wq, wk, wv, wo, n_head, mask=True)
    assert jnp.allclose(out_c, ref_c, atol=5e-3, rtol=5e-3), \
        "mismatch vs reference (causal, f32)"

    # 3) cross-attention (xa provided, S != T), bf16
    S = 32
    xa = jax.random.normal(kxa, (B, S, n_state), dtype=jnp.float32)
    out_x = jax.block_until_ready(
        multi_head_attention(x, wq, wk, wv, wo, n_head, xa=xa))
    ref_x = _reference(x, wq, wk, wv, wo, n_head, xa=xa)
    assert jnp.allclose(out_x, ref_x, atol=1e-1, rtol=1e-1), \
        "mismatch vs reference (cross-attn, bf16)"

    print("KERNEL_OK")
</pallas_src>

<mosaic_0001>
module attributes {stable_mosaic.version = 11 : i64} {
  func.func @_mha_kernel(%arg0: i32, %arg1: i32, %arg2: i32, %arg3: memref<1x16x128xbf16, #tpu.memory_space<vmem>>, %arg4: memref<1x16x128xbf16, #tpu.memory_space<vmem>>, %arg5: memref<4x32x128xbf16, #tpu.memory_space<vmem>>, %arg6: memref<4x32x128xbf16, #tpu.memory_space<vmem>>, %arg7: memref<4x32x128xbf16, #tpu.memory_space<vmem>>, %arg8: memref<4x32x128xbf16, #tpu.memory_space<vmem>>, %arg9: memref<1x16x128xf32, #tpu.memory_space<vmem>>, %arg10: memref<16x128xf32, #tpu.memory_space<vmem>>, %arg11: memref<4x16x32xbf16, #tpu.memory_space<vmem>>, %arg12: memref<4x16x32xbf16, #tpu.memory_space<vmem>>) attributes {dimension_semantics = [#tpu.dimension_semantics<parallel>, #tpu.dimension_semantics<parallel>, #tpu.dimension_semantics<arbitrary>], iteration_bounds = array<i64: 2, 1, 4>, scalar_prefetch = 0 : i64, scratch_operands = 3 : i64, tpu.core_type = #tpu.core_type<tc>, window_params = [{transform_indices = @transform_0, window_bounds = array<i64: 1, 16, 128>}, {transform_indices = @transform_1, window_bounds = array<i64: 1, 16, 128>}, {pipeline_mode = #tpu.pipeline_mode<synchronous>, transform_indices = @transform_2, window_bounds = array<i64: 4, 32, 128>}, {pipeline_mode = #tpu.pipeline_mode<synchronous>, transform_indices = @transform_3, window_bounds = array<i64: 4, 32, 128>}, {pipeline_mode = #tpu.pipeline_mode<synchronous>, transform_indices = @transform_4, window_bounds = array<i64: 4, 32, 128>}, {pipeline_mode = #tpu.pipeline_mode<synchronous>, transform_indices = @transform_5, window_bounds = array<i64: 4, 32, 128>}, {transform_indices = @transform_6, window_bounds = array<i64: 1, 16, 128>}]} {
    %c0_i32 = arith.constant 0 : i32
    %0 = arith.cmpi eq, %arg1, %c0_i32 : i32
    %1 = arith.extui %0 : i1 to i32
    %c0_i32_0 = arith.constant 0 : i32
    %2 = arith.cmpi ne, %1, %c0_i32_0 : i32
    scf.if %2 {
      %c0_24 = arith.constant 0 : index
      %c0_25 = arith.constant 0 : index
      %c0_26 = arith.constant 0 : index
      %45 = vector.load %arg4[%c0_24, %c0_25, %c0_26] : memref<1x16x128xbf16, #tpu.memory_space<vmem>>, vector<1x16x128xbf16>
      %46 = vector.shape_cast %45 : vector<1x16x128xbf16> to vector<16x128xbf16>
      %47 = arith.index_cast %arg2 : i32 to index
      %c0_27 = arith.constant 0 : index
      %c0_28 = arith.constant 0 : index
      %48 = vector.load %arg6[%47, %c0_27, %c0_28] : memref<4x32x128xbf16, #tpu.memory_space<vmem>>, vector<1x32x128xbf16>
      %49 = vector.shape_cast %48 : vector<1x32x128xbf16> to vector<32x128xbf16>
      %cst_29 = arith.constant dense<0.000000e+00> : vector<16x32xf32>
      %50 = tpu.matmul %46, %49, %cst_29 {dimension_numbers = #tpu.dot_dimension_numbers<[1], [1], [0], [0], [0, 0, 1, 0], [], []>} : vector<16x128xbf16>, vector<32x128xbf16>, vector<16x32xf32> -> vector<16x32xf32>
      %51 = arith.index_cast %arg2 : i32 to index
      %c0_30 = arith.constant 0 : index
      %c0_31 = arith.constant 0 : index
      %52 = vector.load %arg7[%51, %c0_30, %c0_31] : memref<4x32x128xbf16, #tpu.memory_space<vmem>>, vector<1x32x128xbf16>
      %53 = vector.shape_cast %52 : vector<1x32x128xbf16> to vector<32x128xbf16>
      %cst_32 = arith.constant dense<0.000000e+00> : vector<16x32xf32>
      %54 = tpu.matmul %46, %53, %cst_32 {dimension_numbers = #tpu.dot_dimension_numbers<[1], [1], [0], [0], [0, 0, 1, 0], [], []>} : vector<16x128xbf16>, vector<32x128xbf16>, vector<16x32xf32> -> vector<16x32xf32>
      %55 = arith.truncf %50 : vector<16x32xf32> to vector<16x32xbf16>
      %56 = arith.index_cast %arg2 : i32 to index
      %c0_33 = arith.constant 0 : index
      %c0_34 = arith.constant 0 : index
      %57 = vector.load %arg11[%56, %c0_33, %c0_34] : memref<4x16x32xbf16, #tpu.memory_space<vmem>>, vector<1x16x32xbf16>
      %58 = vector.shape_cast %57 : vector<1x16x32xbf16> to vector<16x32xbf16>
      %59 = vector.shape_cast %55 : vector<16x32xbf16> to vector<1x16x32xbf16>
      tpu.vector_store %arg11[%56, %c0_33, %c0_34], %59 {strides = array<i32>} : memref<4x16x32xbf16, #tpu.memory_space<vmem>>, vector<1x16x32xbf16>,
      %60 = arith.truncf %54 : vector<16x32xf32> to vector<16x32xbf16>
      %61 = arith.index_cast %arg2 : i32 to index
      %c0_35 = arith.constant 0 : index
      %c0_36 = arith.constant 0 : index
      %62 = vector.load %arg12[%61, %c0_35, %c0_36] : memref<4x16x32xbf16, #tpu.memory_space<vmem>>, vector<1x16x32xbf16>
      %63 = vector.shape_cast %62 : vector<1x16x32xbf16> to vector<16x32xbf16>
      %64 = vector.shape_cast %60 : vector<16x32xbf16> to vector<1x16x32xbf16>
      tpu.vector_store %arg12[%61, %c0_35, %c0_36], %64 {strides = array<i32>} : memref<4x16x32xbf16, #tpu.memory_space<vmem>>, vector<1x16x32xbf16>,
    } else {
    }
    %c0_i32_1 = arith.constant 0 : i32
    %3 = arith.cmpi eq, %arg2, %c0_i32_1 : i32
    %4 = arith.extui %3 : i1 to i32
    %c0_i32_2 = arith.constant 0 : i32
    %5 = arith.cmpi ne, %4, %c0_i32_2 : i32
    scf.if %5 {
      %cst_24 = arith.constant 0.000000e+00 : f32
      %45 = vector.broadcast %cst_24 : f32 to vector<16x128xf32>
      %c0_25 = arith.constant 0 : index
      %c0_26 = arith.constant 0 : index
      %46 = vector.load %arg10[%c0_25, %c0_26] : memref<16x128xf32, #tpu.memory_space<vmem>>, vector<16x128xf32>
      tpu.vector_store %arg10[%c0_25, %c0_26], %45 {strides = array<i32>} : memref<16x128xf32, #tpu.memory_space<vmem>>, vector<16x128xf32>,
    } else {
    }
    %c0 = arith.constant 0 : index
    %c0_3 = arith.constant 0 : index
    %c0_4 = arith.constant 0 : index
    %6 = vector.load %arg3[%c0, %c0_3, %c0_4] : memref<1x16x128xbf16, #tpu.memory_space<vmem>>, vector<1x16x128xbf16>
    %7 = vector.shape_cast %6 : vector<1x16x128xbf16> to vector<16x128xbf16>
    %8 = arith.index_cast %arg2 : i32 to index
    %c0_5 = arith.constant 0 : index
    %c0_6 = arith.constant 0 : index
    %9 = vector.load %arg5[%8, %c0_5, %c0_6] : memref<4x32x128xbf16, #tpu.memory_space<vmem>>, vector<1x32x128xbf16>
    %10 = vector.shape_cast %9 : vector<1x32x128xbf16> to vector<32x128xbf16>
    %cst = arith.constant dense<0.000000e+00> : vector<16x32xf32>
    %11 = tpu.matmul %7, %10, %cst {dimension_numbers = #tpu.dot_dimension_numbers<[1], [1], [0], [0], [0, 0, 1, 0], [], []>} : vector<16x128xbf16>, vector<32x128xbf16>, vector<16x32xf32> -> vector<16x32xf32>
    %cst_7 = arith.constant 0.176776692 : f32
    %12 = vector.broadcast %cst_7 : f32 to vector<16x32xf32>
    %13 = arith.mulf %11, %12 : vector<16x32xf32>
    %14 = arith.truncf %13 : vector<16x32xf32> to vector<16x32xbf16>
    %15 = arith.index_cast %arg2 : i32 to index
    %c0_8 = arith.constant 0 : index
    %c0_9 = arith.constant 0 : index
    %16 = vector.load %arg11[%15, %c0_8, %c0_9] : memref<4x16x32xbf16, #tpu.memory_space<vmem>>, vector<1x16x32xbf16>
    %17 = vector.shape_cast %16 : vector<1x16x32xbf16> to vector<16x32xbf16>
    %18 = arith.index_cast %arg2 : i32 to index
    %c0_10 = arith.constant 0 : index
    %c0_11 = arith.constant 0 : index
    %19 = vector.load %arg12[%18, %c0_10, %c0_11] : memref<4x16x32xbf16, #tpu.memory_space<vmem>>, vector<1x16x32xbf16>
    %20 = vector.shape_cast %19 : vector<1x16x32xbf16> to vector<16x32xbf16>
    %cst_12 = arith.constant dense<0.000000e+00> : vector<16x16xf32>
    %21 = tpu.matmul %14, %17, %cst_12 {dimension_numbers = #tpu.dot_dimension_numbers<[1], [1], [0], [0], [0, 0, 1, 0], [], []>} : vector<16x32xbf16>, vector<16x32xbf16>, vector<16x16xf32> -> vector<16x16xf32>
    %cst_13 = arith.constant dense<0xFF800000> : vector<16xf32>
    %22 = vector.multi_reduction <maximumf>, %21, %cst_13 [1] : vector<16x16xf32> to vector<16xf32>
    %23 = vector.shape_cast %22 : vector<16xf32> to vector<16x1xf32>
    %24 = vector.broadcast %23 : vector<16x1xf32> to vector<16x16xf32>
    %25 = arith.subf %21, %24 : vector<16x16xf32>
    %26 = math.exp %25 : vector<16x16xf32>
    %cst_14 = arith.constant dense<0.000000e+00> : vector<16xf32>
    %27 = vector.multi_reduction <add>, %26, %cst_14 [1] : vector<16x16xf32> to vector<16xf32>
    %28 = vector.shape_cast %27 : vector<16xf32> to vector<16x1xf32>
    %29 = arith.truncf %26 : vector<16x16xf32> to vector<16x16xbf16>
    %cst_15 = arith.constant dense<0.000000e+00> : vector<16x32xf32>
    %30 = tpu.matmul %29, %20, %cst_15 {dimension_numbers = #tpu.dot_dimension_numbers<[1], [0], [0], [1], [0, 0, 1, 1], [], []>} : vector<16x16xbf16>, vector<16x32xbf16>, vector<16x32xf32> -> vector<16x32xf32>
    %31 = tpu.reciprocal %28 {approx = true} : vector<16x1xf32> -> vector<16x1xf32>
    %32 = vector.broadcast %31 : vector<16x1xf32> to vector<16x32xf32>
    %33 = arith.mulf %30, %32 : vector<16x32xf32>
    %c0_16 = arith.constant 0 : index
    %c0_17 = arith.constant 0 : index
    %34 = vector.load %arg10[%c0_16, %c0_17] : memref<16x128xf32, #tpu.memory_space<vmem>>, vector<16x128xf32>
    %35 = arith.truncf %33 : vector<16x32xf32> to vector<16x32xbf16>
    %36 = arith.index_cast %arg2 : i32 to index
    %c0_18 = arith.constant 0 : index
    %c0_19 = arith.constant 0 : index
    %37 = vector.load %arg8[%36, %c0_18, %c0_19] : memref<4x32x128xbf16, #tpu.memory_space<vmem>>, vector<1x32x128xbf16>
    %38 = vector.shape_cast %37 : vector<1x32x128xbf16> to vector<32x128xbf16>
    %cst_20 = arith.constant dense<0.000000e+00> : vector<16x128xf32>
    %39 = tpu.matmul %35, %38, %cst_20 {dimension_numbers = #tpu.dot_dimension_numbers<[1], [0], [0], [1], [0, 0, 1, 1], [], []>} : vector<16x32xbf16>, vector<32x128xbf16>, vector<16x128xf32> -> vector<16x128xf32>
    %40 = arith.addf %34, %39 : vector<16x128xf32>
    %c0_21 = arith.constant 0 : index
    %c0_22 = arith.constant 0 : index
    %41 = vector.load %arg10[%c0_21, %c0_22] : memref<16x128xf32, #tpu.memory_space<vmem>>, vector<16x128xf32>
    tpu.vector_store %arg10[%c0_21, %c0_22], %40 {strides = array<i32>} : memref<16x128xf32, #tpu.memory_space<vmem>>, vector<16x128xf32>,
    %c3_i32 = arith.constant 3 : i32
    %42 = arith.cmpi eq, %arg2, %c3_i32 : i32
    %43 = arith.extui %42 : i1 to i32
    %c0_i32_23 = arith.constant 0 : i32
    %44 = arith.cmpi ne, %43, %c0_i32_23 : i32
    scf.if %44 {
      %c0_24 = arith.constant 0 : index
      %c0_25 = arith.constant 0 : index
      %45 = vector.load %arg10[%c0_24, %c0_25] : memref<16x128xf32, #tpu.memory_space<vmem>>, vector<16x128xf32>
      %c0_26 = arith.constant 0 : index
      %c0_27 = arith.constant 0 : index
      %c0_28 = arith.constant 0 : index
      %46 = vector.load %arg9[%c0_26, %c0_27, %c0_28] : memref<1x16x128xf32, #tpu.memory_space<vmem>>, vector<1x16x128xf32>
      %47 = vector.shape_cast %46 : vector<1x16x128xf32> to vector<16x128xf32>
      %48 = vector.shape_cast %45 : vector<16x128xf32> to vector<1x16x128xf32>
      tpu.vector_store %arg9[%c0_26, %c0_27, %c0_28], %48 {strides = array<i32>} : memref<1x16x128xf32, #tpu.memory_space<vmem>>, vector<1x16x128xf32>,
    } else {
    }
    return
  }
  func.func @transform_0(%arg0: i32, %arg1: i32, %arg2: i32) -> (i32, i32, i32) {
    %c0_i32 = arith.constant 0 : i32
    %c0_i32_0 = arith.constant 0 : i32
    return %arg0, %arg1, %c0_i32 : i32, i32, i32
  }
  func.func @transform_1(%arg0: i32, %arg1: i32, %arg2: i32) -> (i32, i32, i32) {
    %c0_i32 = arith.constant 0 : i32
    %c0_i32_0 = arith.constant 0 : i32
    %c0_i32_1 = arith.constant 0 : i32
    return %arg0, %c0_i32, %c0_i32_0 : i32, i32, i32
  }
  func.func @transform_2(%arg0: i32, %arg1: i32, %arg2: i32) -> (i32, i32, i32) {
    %c0_i32 = arith.constant 0 : i32
    %c0_i32_0 = arith.constant 0 : i32
    %c0_i32_1 = arith.constant 0 : i32
    %c0_i32_2 = arith.constant 0 : i32
    return %c0_i32, %c0_i32_0, %c0_i32_1 : i32, i32, i32
  }
  func.func @transform_3(%arg0: i32, %arg1: i32, %arg2: i32) -> (i32, i32, i32) {
    %c0_i32 = arith.constant 0 : i32
    %c0_i32_0 = arith.constant 0 : i32
    %c0_i32_1 = arith.constant 0 : i32
    %c0_i32_2 = arith.constant 0 : i32
    return %c0_i32, %c0_i32_0, %c0_i32_1 : i32, i32, i32
  }
  func.func @transform_4(%arg0: i32, %arg1: i32, %arg2: i32) -> (i32, i32, i32) {
    %c0_i32 = arith.constant 0 : i32
    %c0_i32_0 = arith.constant 0 : i32
    %c0_i32_1 = arith.constant 0 : i32
    %c0_i32_2 = arith.constant 0 : i32
    return %c0_i32, %c0_i32_0, %c0_i32_1 : i32, i32, i32
  }
  func.func @transform_5(%arg0: i32, %arg1: i32, %arg2: i32) -> (i32, i32, i32) {
    %c0_i32 = arith.constant 0 : i32
    %c0_i32_0 = arith.constant 0 : i32
    %c0_i32_1 = arith.constant 0 : i32
    %c0_i32_2 = arith.constant 0 : i32
    return %c0_i32, %c0_i32_0, %c0_i32_1 : i32, i32, i32
  }
  func.func @transform_6(%arg0: i32, %arg1: i32, %arg2: i32) -> (i32, i32, i32) {
    %c0_i32 = arith.constant 0 : i32
    %c0_i32_0 = arith.constant 0 : i32
    return %arg0, %arg1, %c0_i32 : i32, i32, i32
  }
}

</mosaic_0001>

<llo_original>
// kernel: tpu_custom_call.1
$region0: #{tpu_custom_call.1}
  #allocation0 [shape = 'u32[]', space=smem, size = 0x4, offset = 0x4, fixed_abs, tag = 'smem constant byte address 0x4 - core index']
  #allocation1 [shape = 'u32[144,128]{1,0:T(1,128)}', space=vmem, size = 0x12000, scoped, tag = 'internal scratch']
  #allocation2 [shape = 'f32[16,128]{1,0:T(8,128)}', space=vmem, size = 0x2000, scoped, tag = 'scratch operand']
  #allocation3 [shape = 'bf16[4,16,32]{2,1,0:T(16,128)(2,1)}', space=vmem, size = 0x4000, scoped, tag = 'scratch operand']
  #allocation4 [shape = 'bf16[4,16,32]{2,1,0:T(16,128)(2,1)}', space=vmem, size = 0x4000, scoped, tag = 'scratch operand']
  %s0 = inlined_call_operand.hbm [shape: bf16[2,16,128], index: 0, kind: input, shape index: {}]
  %s1 = inlined_call_operand.hbm [shape: bf16[2,16,128], index: 1, kind: input, shape index: {}]
  %s2 = inlined_call_operand.hbm [shape: bf16[4,32,128], index: 2, kind: input, shape index: {}]
  %s3 = inlined_call_operand.hbm [shape: bf16[4,32,128], index: 3, kind: input, shape index: {}]
  %s4 = inlined_call_operand.hbm [shape: bf16[4,32,128], index: 4, kind: input, shape index: {}]
  %s5 = inlined_call_operand.hbm [shape: bf16[4,32,128], index: 5, kind: input, shape index: {}]
  %s6 = inlined_call_operand.hbm [shape: f32[2,16,128], index: 6, kind: output, shape index: {}]
  %s7 = sld [smem:[#allocation0]]
  $region93: #{tpu_custom_call.1} parent=0
    _
  %s9 = ssub.s32 1, %s7
  %s10 = scalar_select 0, %s9, %s7
  $region1: #{tpu_custom_call.1} parent=0
    #allocation5 [shape = 'u8[8192]{0}', space=vmem, size = 0x2000, scoped, tag = 'input window, operand 0']
    #allocation6 [shape = 's32[2]{0}', space=sflag, size = 0x8, scoped, tag = 'scoped memory for tpu_custom_call.1']
    #allocation7 [shape = 's32[2]{0}', space=sflag, size = 0x8, scoped, tag = 'scoped memory for tpu_custom_call.1']
    #allocation8 [shape = 'u8[8192]{0}', space=vmem, size = 0x2000, scoped, tag = 'input window, operand 1']
    #allocation9 [shape = 's32[2]{0}', space=sflag, size = 0x8, scoped, tag = 'scoped memory for tpu_custom_call.1']
    #allocation10 [shape = 'u8[32768]{0}', space=vmem, size = 0x8000, scoped, tag = 'input window, operand 2, single buffered']
    #allocation11 [shape = 'u8[32768]{0}', space=vmem, size = 0x8000, scoped, tag = 'input window, operand 3, single buffered']
    #allocation12 [shape = 's32[1]{0}', space=sflag, size = 0x4, scoped, tag = 'scoped memory for tpu_custom_call.1']
    #allocation13 [shape = 'u8[32768]{0}', space=vmem, size = 0x8000, scoped, tag = 'input window, operand 4, single buffered']
    #allocation14 [shape = 'u8[32768]{0}', space=vmem, size = 0x8000, scoped, tag = 'input window, operand 5, single buffered']
    #allocation15 [shape = 's32[1]{0}', space=sflag, size = 0x4, scoped, tag = 'scoped memory for tpu_custom_call.1']
    #allocation16 [shape = 'u8[16384]{0}', space=vmem, size = 0x4000, scoped, tag = 'output window, operand 0']
    %11 = vsyncpa [#allocation6], 0
    %s12 = scalar_lea.sflag [#allocation6], 1
    %13 = vsyncpa %s12, 0
    %14 = vsyncpa [#allocation9], 0
    %s15 = scalar_lea.sflag [#allocation9], 1
    %16 = vsyncpa %s15, 0
    %17 = vsyncpa [#allocation12], 0
    %18 = vsyncpa [#allocation15], 0
    %19 = vsyncpa [#allocation7], 0
    %s20 = scalar_lea.sflag [#allocation7], 1
    %21 = vsyncpa %s20, 0
    loop: start=0, step=1, limit=10
    $region2: #{tpu_custom_call.1} parent=1 // loop_pre_header
      _
    $region3: #{tpu_custom_call.1} parent=1 // loop_header
      %s23 = sphi 0, %s27
      %p24 = scmp.ge.s32.totalorder %s23, 10
      %s30 = sphi 0, %s49
      %s31 = sphi 0, %s45
      %s32 = sphi 0, %s41
      %s33 = sphi 0, %s30
      %s34 = sphi 0, %s31
      %s35 = sphi 0, %s32
      %s36 = sphi 0, %s33
      %s37 = sphi 0, %s34
      %s38 = sphi 0, %s35
      %s54 = sphi 0, %s56
      %s57 = sphi 0, %s54
      %s58 = sphi 0, %s57
      %s74 = sphi 0, %s58
      %s80 = sphi 0, %s82
      %s83 = sphi 0, %s80
      %s84 = sphi 0, %s83
      %s100 = sphi 0, %s84
      %s104 = sphi 0, %s104
      %s106 = sphi 0, %s104
      %s107 = sphi 0, %s106
      %s121 = sphi 0, %s107
      %s125 = sphi 0, %s125
      %s127 = sphi 0, %s125
      %s128 = sphi 0, %s127
      %s142 = sphi 0, %s128
      %s146 = sphi 0, %s146
      %s148 = sphi 0, %s146
      %s149 = sphi 0, %s148
      %s163 = sphi 0, %s149
      %s167 = sphi 0, %s167
      %s169 = sphi 0, %s167
      %s170 = sphi 0, %s169
      %s184 = sphi 0, %s170
      %s192 = sphi 0, %s194
      %s195 = sphi 0, %s192
      %s196 = sphi 0, %s195
      %s212 = sphi 0, %s196
    $region4: #{tpu_custom_call.1} parent=1 // loop_header_branch
      %26 = sbr.rel (%p24) target = $region8
    $region5: #{tpu_custom_call.1} parent=1 // loop_body
      %s28 = ssub.s32 %s23, 1
      %s29 = ssub.s32 %s23, 2
      %s39 = sadd.s32 1, %s32
      %p40 = scmp.ge.s32.totalorder %s39, 4
      %s41 = scalar_select %p40, 0, %s39
      %s42 = sadd.s32 1, %s31
      %s43 = scalar_select %p40, %s42, %s31
      %p44 = scmp.ge.s32.totalorder %s43, 1
      %s45 = scalar_select %p44, 0, %s43
      %s46 = sadd.s32 1, %s30
      %s47 = scalar_select %p44, %s46, %s30
      %p48 = scmp.ge.s32.totalorder %s47, 2
      %s49 = scalar_select %p48, 0, %s47
      %s50 = ssub.s32 %s30, %s49
      %s51 = ssub.s32 %s31, %s45
      %s52 = sor.u32 %s50, %s51
      %p53 = scmp.eq.s32.totalorder %s52, 0
      %s55 = sadd.s32 %s54, 1
      %s56 = scalar_select %p53, %s54, %s55
      %p59 = pneg %p53
      %p60 = scmp.eq.s32.totalorder %s23, 7
      %p61 = por %p59, %p60
      %p62 = scmp.ne.s32.totalorder %s54, %s57
      %p63 = scmp.eq.s32.totalorder %s23, 0
      %p64 = por %p62, %p63
      %p65 = scmp.ne.s32.totalorder %s54, %s57
      %p66 = scmp.eq.s32.totalorder %s28, 7
      %p67 = por %p65, %p66
      %p68 = scmp.ne.s32.totalorder %s57, %s58
      %p69 = scmp.eq.s32.totalorder %s28, 0
      %p70 = por %p68, %p69
      %p71 = scmp.ne.s32.totalorder %s57, %s58
      %p72 = scmp.eq.s32.totalorder %s29, 7
      %p73 = por %p71, %p72
      %p75 = scmp.ne.s32.totalorder %s58, %s74
      %p76 = scmp.eq.s32.totalorder %s29, 0
      %p77 = por %p75, %p76
      %s78 = ssub.s32 %s30, %s49
      %p79 = scmp.eq.s32.totalorder %s78, 0
      %s81 = sadd.s32 %s80, 1
      %s82 = scalar_select %p79, %s80, %s81
      %p85 = pneg %p79
      %p86 = scmp.eq.s32.totalorder %s23, 7
      %p87 = por %p85, %p86
      %p88 = scmp.ne.s32.totalorder %s80, %s83
      %p89 = scmp.eq.s32.totalorder %s23, 0
      %p90 = por %p88, %p89
      %p91 = scmp.ne.s32.totalorder %s80, %s83
      %p92 = scmp.eq.s32.totalorder %s28, 7
      %p93 = por %p91, %p92
      %p94 = scmp.ne.s32.totalorder %s83, %s84
      %p95 = scmp.eq.s32.totalorder %s28, 0
      %p96 = por %p94, %p95
      %p97 = scmp.ne.s32.totalorder %s83, %s84
      %p98 = scmp.eq.s32.totalorder %s29, 7
      %p99 = por %p97, %p98
      %p101 = scmp.ne.s32.totalorder %s84, %s100
      %p102 = scmp.eq.s32.totalorder %s29, 0
      %p103 = por %p101, %p102
      %s105 = sadd.s32 %s104, 1
      %p108 = scmp.eq.s32.totalorder %s23, 7
      %p109 = scmp.ne.s32.totalorder %s104, %s106
      %p110 = scmp.eq.s32.totalorder %s23, 0
      %p111 = por %p109, %p110
      %p112 = scmp.ne.s32.totalorder %s104, %s106
      %p113 = scmp.eq.s32.totalorder %s28, 7
      %p114 = por %p112, %p113
      %p115 = scmp.ne.s32.totalorder %s106, %s107
      %p116 = scmp.eq.s32.totalorder %s28, 0
      %p117 = por %p115, %p116
      %p118 = scmp.ne.s32.totalorder %s106, %s107
      %p119 = scmp.eq.s32.totalorder %s29, 7
      %p120 = por %p118, %p119
      %p122 = scmp.ne.s32.totalorder %s107, %s121
      %p123 = scmp.eq.s32.totalorder %s29, 0
      %p124 = por %p122, %p123
      %s126 = sadd.s32 %s125, 1
      %p129 = scmp.eq.s32.totalorder %s23, 7
      %p130 = scmp.ne.s32.totalorder %s125, %s127
      %p131 = scmp.eq.s32.totalorder %s23, 0
      %p132 = por %p130, %p131
      %p133 = scmp.ne.s32.totalorder %s125, %s127
      %p134 = scmp.eq.s32.totalorder %s28, 7
      %p135 = por %p133, %p134
      %p136 = scmp.ne.s32.totalorder %s127, %s128
      %p137 = scmp.eq.s32.totalorder %s28, 0
      %p138 = por %p136, %p137
      %p139 = scmp.ne.s32.totalorder %s127, %s128
      %p140 = scmp.eq.s32.totalorder %s29, 7
      %p141 = por %p139, %p140
      %p143 = scmp.ne.s32.totalorder %s128, %s142
      %p144 = scmp.eq.s32.totalorder %s29, 0
      %p145 = por %p143, %p144
      %s147 = sadd.s32 %s146, 1
      %p150 = scmp.eq.s32.totalorder %s23, 7
      %p151 = scmp.ne.s32.totalorder %s146, %s148
      %p152 = scmp.eq.s32.totalorder %s23, 0
      %p153 = por %p151, %p152
      %p154 = scmp.ne.s32.totalorder %s146, %s148
      %p155 = scmp.eq.s32.totalorder %s28, 7
      %p156 = por %p154, %p155
      %p157 = scmp.ne.s32.totalorder %s148, %s149
      %p158 = scmp.eq.s32.totalorder %s28, 0
      %p159 = por %p157, %p158
      %p160 = scmp.ne.s32.totalorder %s148, %s149
      %p161 = scmp.eq.s32.totalorder %s29, 7
      %p162 = por %p160, %p161
      %p164 = scmp.ne.s32.totalorder %s149, %s163
      %p165 = scmp.eq.s32.totalorder %s29, 0
      %p166 = por %p164, %p165
      %s168 = sadd.s32 %s167, 1
      %p171 = scmp.eq.s32.totalorder %s23, 7
      %p172 = scmp.ne.s32.totalorder %s167, %s169
      %p173 = scmp.eq.s32.totalorder %s23, 0
      %p174 = por %p172, %p173
      %p175 = scmp.ne.s32.totalorder %s167, %s169
      %p176 = scmp.eq.s32.totalorder %s28, 7
      %p177 = por %p175, %p176
      %p178 = scmp.ne.s32.totalorder %s169, %s170
      %p179 = scmp.eq.s32.totalorder %s28, 0
      %p180 = por %p178, %p179
      %p181 = scmp.ne.s32.totalorder %s169, %s170
      %p182 = scmp.eq.s32.totalorder %s29, 7
      %p183 = por %p181, %p182
      %p185 = scmp.ne.s32.totalorder %s170, %s184
      %p186 = scmp.eq.s32.totalorder %s29, 0
      %p187 = por %p185, %p186
      %s188 = ssub.s32 %s30, %s49
      %s189 = ssub.s32 %s31, %s45
      %s190 = sor.u32 %s188, %s189
      %p191 = scmp.eq.s32.totalorder %s190, 0
      %s193 = sadd.s32 %s192, 1
      %s194 = scalar_select %p191, %s192, %s193
      %p197 = pneg %p191
      %p198 = scmp.eq.s32.totalorder %s23, 7
      %p199 = por %p197, %p198
      %p200 = scmp.ne.s32.totalorder %s192, %s195
      %p201 = scmp.eq.s32.totalorder %s23, 0
      %p202 = por %p200, %p201
      %p203 = scmp.ne.s32.totalorder %s192, %s195
      %p204 = scmp.eq.s32.totalorder %s28, 7
      %p205 = por %p203, %p204
      %p206 = scmp.ne.s32.totalorder %s195, %s196
      %p207 = scmp.eq.s32.totalorder %s28, 0
      %p208 = por %p206, %p207
      %p209 = scmp.ne.s32.totalorder %s195, %s196
      %p210 = scmp.eq.s32.totalorder %s29, 7
      %p211 = por %p209, %p210
      %p213 = scmp.ne.s32.totalorder %s196, %s212
      %p214 = scmp.eq.s32.totalorder %s29, 0
      %p215 = por %p213, %p214
      %p216 = scmp.le.s32.totalorder 1, %s23
      %p217 = scmp.lt.s32.totalorder %s23, 9
      %p218 = pnand %p216, %p217
      %p219 = pneg %p218
      // Predicated region
      $region9: #{tpu_custom_call.1} parent=5 // pred_check
        _
      $region10: #{tpu_custom_call.1} parent=5 // pred_check_branch
        %221 = sbr.rel (%p218) target = $region12
      $region11: #{tpu_custom_call.1} parent=5 // pred_region
        %s222 = ssub.s32 %s23, 1
        // Predicated region
        $region13: #{tpu_custom_call.1} parent=11 // pred_check
          %p223 = pneg %p117
        $region14: #{tpu_custom_call.1} parent=11 // pred_check_branch
          %225 = sbr.rel (%p223) target = $region16
        $region15: #{tpu_custom_call.1} parent=11 // pred_region
          %s227 = ssub.s32 1024, 1024
          %228 = vsyncadd [#allocation9], %s227
          %s229 = sshll.u32 [#allocation10], 4
          %s230 = int_to_ptr.vmem [resolvable:$true] %s229
          %235 = dma.hbm_to_vmem [thread:$0]  %s2, 1024, %s230, [#allocation9], 64, 64, 4
        $region16: #{tpu_custom_call.1} parent=11 // pred_fallthru
          _
        // Predicated region
        $region17: #{tpu_custom_call.1} parent=11 // pred_check
          %p236 = pneg %p138
        $region18: #{tpu_custom_call.1} parent=11 // pred_check_branch
          %238 = sbr.rel (%p236) target = $region20
        $region19: #{tpu_custom_call.1} parent=11 // pred_region
          %s240 = ssub.s32 1024, 1024
          %241 = vsyncadd [#allocation12], %s240
          %s242 = sshll.u32 [#allocation11], 4
          %s243 = int_to_ptr.vmem [resolvable:$true] %s242
          %248 = dma.hbm_to_vmem [thread:$0]  %s3, 1024, %s243, [#allocation12], 64, 64, 4
        $region20: #{tpu_custom_call.1} parent=11 // pred_fallthru
          _
        // Predicated region
        $region21: #{tpu_custom_call.1} parent=11 // pred_check
          %p249 = pneg %p159
        $region22: #{tpu_custom_call.1} parent=11 // pred_check_branch
          %251 = sbr.rel (%p249) target = $region24
        $region23: #{tpu_custom_call.1} parent=11 // pred_region
          %s253 = ssub.s32 1024, 1024
          %254 = vsyncadd [#allocation12], %s253
          %s255 = sshll.u32 [#allocation13], 4
          %s256 = int_to_ptr.vmem [resolvable:$true] %s255
          %261 = dma.hbm_to_vmem [thread:$0]  %s4, 1024, %s256, [#allocation12], 64, 64, 4
        $region24: #{tpu_custom_call.1} parent=11 // pred_fallthru
          _
        // Predicated region
        $region25: #{tpu_custom_call.1} parent=11 // pred_check
          %p262 = pneg %p180
        $region26: #{tpu_custom_call.1} parent=11 // pred_check_branch
          %264 = sbr.rel (%p262) target = $region28
        $region27: #{tpu_custom_call.1} parent=11 // pred_region
          %s266 = ssub.s32 1024, 1024
          %267 = vsyncadd [#allocation15], %s266
          %s268 = sshll.u32 [#allocation14], 4
          %s269 = int_to_ptr.vmem [resolvable:$true] %s268
          %274 = dma.hbm_to_vmem [thread:$0]  %s5, 1024, %s269, [#allocation15], 64, 64, 4
        $region28: #{tpu_custom_call.1} parent=11 // pred_fallthru
          _
      $region12: #{tpu_custom_call.1} parent=5 // pred_fallthru
        _
      %p275 = scmp.lt.s32.totalorder %s23, 8
      // Predicated region
      $region29: #{tpu_custom_call.1} parent=5 // pred_check
        %p276 = pneg %p275
      $region30: #{tpu_custom_call.1} parent=5 // pred_check_branch
        %278 = sbr.rel (%p276) target = $region32
      $region31: #{tpu_custom_call.1} parent=5 // pred_region
        // Predicated region
        $region33: #{tpu_custom_call.1} parent=31 // pred_check
          %p279 = pneg %p64
        $region34: #{tpu_custom_call.1} parent=31 // pred_check_branch
          %281 = sbr.rel (%p279) target = $region36
        $region35: #{tpu_custom_call.1} parent=31 // pred_region
          %s282 = sand.u32 %s54, 1
          %s283 = scalar_lea.sflag [#allocation6], %s282
          %s284 = sand.u32 %s54, 1
          %s285 = smul.addr %s284, 8
          %s286 = scalar_lea.vmem [#allocation5], %s285
          %s287 = smul.u32 2, %s31
          %s289 = ssub.s32 128, 128
          %290 = vsyncadd %s283, %s289
          %s291 = smul.addr %s30, 2
          %s292 = sadd.s32 %s287, %s291
          %s293 = smul.addr %s292, 64
          %s294 = scalar_lea.hbm %s0, %s293
          %s295 = sshll.u32 %s286, 4
          %s296 = int_to_ptr.vmem [resolvable:$true] %s295
          %301 = dma.hbm_to_vmem [thread:$0]  %s294, 128, %s296, %s283, 64, 64, 4
        $region36: #{tpu_custom_call.1} parent=31 // pred_fallthru
          _
        // Predicated region
        $region37: #{tpu_custom_call.1} parent=31 // pred_check
          %p302 = pneg %p90
        $region38: #{tpu_custom_call.1} parent=31 // pred_check_branch
          %304 = sbr.rel (%p302) target = $region40
        $region39: #{tpu_custom_call.1} parent=31 // pred_region
          %s305 = sand.u32 %s23, 1
          %s306 = scalar_lea.sflag [#allocation9], %s305
          %s307 = sand.u32 %s80, 1
          %s308 = smul.addr %s307, 8
          %s309 = scalar_lea.vmem [#allocation8], %s308
          %s311 = ssub.s32 128, 128
          %312 = vsyncadd %s306, %s311
          %s313 = smul.addr %s30, 2
          %s314 = smul.addr %s313, 64
          %s315 = scalar_lea.hbm %s1, %s314
          %s316 = sshll.u32 %s309, 4
          %s317 = int_to_ptr.vmem [resolvable:$true] %s316
          %322 = dma.hbm_to_vmem [thread:$0]  %s315, 128, %s317, %s306, 64, 64, 4
        $region40: #{tpu_custom_call.1} parent=31 // pred_fallthru
          _
      $region32: #{tpu_custom_call.1} parent=5 // pred_fallthru
        _
      %p323 = scmp.le.s32.totalorder 1, %s23
      %p324 = scmp.lt.s32.totalorder %s23, 9
      %p325 = pnand %p323, %p324
      %p326 = pneg %p325
      // Predicated region
      $region41: #{tpu_custom_call.1} parent=5 // pred_check
        _
      $region42: #{tpu_custom_call.1} parent=5 // pred_check_branch
        %328 = sbr.rel (%p325) target = $region44
      $region43: #{tpu_custom_call.1} parent=5 // pred_region
        %s329 = ssub.s32 %s23, 1
        %s330 = sand.u32 %s57, 1
        %s331 = scalar_lea.sflag [#allocation6], %s330
        %s332 = sand.u32 %s57, 1
        %s333 = smul.addr %s332, 8
        %s334 = scalar_lea.vmem [#allocation5], %s333
        // Predicated region
        $region45: #{tpu_custom_call.1} parent=43 // pred_check
          %p335 = pneg %p70
        $region46: #{tpu_custom_call.1} parent=43 // pred_check_branch
          %337 = sbr.rel (%p335) target = $region48
        $region47: #{tpu_custom_call.1} parent=43 // pred_region
          %338 = dma.done %s331, 128
        $region48: #{tpu_custom_call.1} parent=43 // pred_fallthru
          _
        %s339 = sand.u32 %s28, 1
        %s340 = scalar_lea.sflag [#allocation9], %s339
        %s341 = sand.u32 %s83, 1
        %s342 = smul.addr %s341, 8
        %s343 = scalar_lea.vmem [#allocation8], %s342
        // Predicated region
        $region49: #{tpu_custom_call.1} parent=43 // pred_check
          %p344 = pneg %p96
        $region50: #{tpu_custom_call.1} parent=43 // pred_check_branch
          %346 = sbr.rel (%p344) target = $region52
        $region51: #{tpu_custom_call.1} parent=43 // pred_region
          %347 = dma.done %s340, 128
        $region52: #{tpu_custom_call.1} parent=43 // pred_fallthru
          _
        // Predicated region
        $region53: #{tpu_custom_call.1} parent=43 // pred_check
          %p348 = pneg %p117
        $region54: #{tpu_custom_call.1} parent=43 // pred_check_branch
          %350 = sbr.rel (%p348) target = $region56
        $region55: #{tpu_custom_call.1} parent=43 // pred_region
          %351 = dma.done [#allocation9], 1024
        $region56: #{tpu_custom_call.1} parent=43 // pred_fallthru
          _
        // Predicated region
        $region57: #{tpu_custom_call.1} parent=43 // pred_check
          %p352 = pneg %p138
        $region58: #{tpu_custom_call.1} parent=43 // pred_check_branch
          %354 = sbr.rel (%p352) target = $region60
        $region59: #{tpu_custom_call.1} parent=43 // pred_region
          %355 = dma.done [#allocation12], 1024
        $region60: #{tpu_custom_call.1} parent=43 // pred_fallthru
          _
        // Predicated region
        $region61: #{tpu_custom_call.1} parent=43 // pred_check
          %p356 = pneg %p159
        $region62: #{tpu_custom_call.1} parent=43 // pred_check_branch
          %358 = sbr.rel (%p356) target = $region64
        $region63: #{tpu_custom_call.1} parent=43 // pred_region
          %359 = dma.done [#allocation12], 1024
        $region64: #{tpu_custom_call.1} parent=43 // pred_fallthru
          _
        // Predicated region
        $region65: #{tpu_custom_call.1} parent=43 // pred_check
          %p360 = pneg %p180
        $region66: #{tpu_custom_call.1} parent=43 // pred_check_branch
          %362 = sbr.rel (%p360) target = $region68
        $region67: #{tpu_custom_call.1} parent=43 // pred_region
          %363 = dma.done [#allocation15], 1024
        $region68: #{tpu_custom_call.1} parent=43 // pred_fallthru
          _
        %s364 = sand.u32 %s57, 1
        %s365 = scalar_lea.sflag [#allocation6], %s364
        %s366 = sand.u32 %s57, 1
        %s367 = smul.addr %s366, 8
        %s368 = scalar_lea.vmem [#allocation5], %s367
        %p369 = pneg %p70
        %p370 = pneg %p67
        %s371 = sand.u32 %s28, 1
        %s372 = scalar_lea.sflag [#allocation9], %s371
        %s373 = sand.u32 %s83, 1
        %s374 = smul.addr %s373, 8
        %s375 = scalar_lea.vmem [#allocation8], %s374
        %p376 = pneg %p96
        %p377 = pneg %p93
        %p378 = pneg %p117
        %p379 = pneg %p114
        %p380 = pneg %p138
        %p381 = pneg %p135
        %p382 = pneg %p159
        %p383 = pneg %p156
        %p384 = pneg %p180
        %p385 = pneg %p177
        %p386 = pneg %p208
        %p387 = pneg %p205
        %s388 = sand.u32 %s195, 1
        %s389 = scalar_lea.sflag [#allocation7], %s388
        %s390 = sand.u32 %s195, 1
        %s391 = smul.addr %s390, 16
        %s392 = scalar_lea.vmem [#allocation16], %s391
        %s393 = smul.u32 2, %s34
        %s394 = smul.u32 2, %s34
        %p396 = scmp.eq.s32.totalorder %s34, 0
        // Predicated region
        $region69: #{tpu_custom_call.1} parent=43 // pred_check
          %p397 = pneg %p396
        $region70: #{tpu_custom_call.1} parent=43 // pred_check_branch
          %399 = sbr.rel (%p397) target = $region72
        $region71: #{tpu_custom_call.1} parent=43 // pred_region
          %v400 = vld [vmem:[%s343] sm:$0xf]
          %v401 = vld [vmem:[%s343 + $0x4] sm:$0xf]
          %s402 = smul.u32 %s35, 4
          %s403 = smul.addr %s402, 4
          %s404 = scalar_lea.vmem [#allocation11], %s403
          %v405 = vld [vmem:[%s404] sm:$0xf]
          %v406 = vld [vmem:[%s404 + $0x4] sm:$0xf]
          %v407 = vld [vmem:[%s404 + $0x8] sm:$0xf]
          %v408 = vld [vmem:[%s404 + $0xc] sm:$0xf]
          %v411 = vunpack.c.l.b16 %v400
          %v412 = vunpack.c.l.b16 %v401
          %v413 = vpack.c.b16 %v412, %v411
          %v419 = vunpack.c.l.b16 %v405
          %v420 = vunpack.c.l.b16 %v406
          %v421 = vunpack.c.l.b16 %v407
          %v422 = vunpack.c.l.b16 %v408
          %v423 = vpack.c.b16 %v420, %v419
          %v424 = vpack.c.b16 %v422, %v421
          %427 = vmatprep.subr.bf16.mxu0 0
          %428 = vmatpush1.bf16.xpose.msra.mxu0 %v423
          %429 = vmatprep.subr.bf16.mxu0 0
          %430 = vmatpush1.bf16.xpose.msra.mxu0 %v424
          %431 = vmatprep.subr.bf16.mxu0 0
          %432 = vmatpush1.bf16.xpose.msra.mxu0 0
          %433 = vmatprep.subr.bf16.mxu0 0
          %434 = vmatpush1.bf16.xpose.msra.mxu0 0
          %435 = vmatprep.subr.bf16.mxu0 0
          %436 = vmatpush1.bf16.xpose.msra.mxu0 0
          %437 = vmatprep.subr.bf16.mxu0 0
          %438 = vmatpush1.bf16.xpose.msra.mxu0 0
          %439 = vmatprep.subr.bf16.mxu0 0
          %440 = vmatpush1.bf16.xpose.msra.mxu0 0
          %441 = vmatprep.subr.bf16.mxu0 0
          %442 = vmatpush1.bf16.xpose.msra.mxu0 0
          %443 = vmatprep.subr.bf16.mxu0 0
          %444 = vmatpush1.bf16.xpose.msra.mxu0 0
          %445 = vmatprep.subr.bf16.mxu0 0
          %446 = vmatpush1.bf16.xpose.msra.mxu0 0
          %447 = vmatprep.subr.bf16.mxu0 0
          %448 = vmatpush1.bf16.xpose.msra.mxu0 0
          %449 = vmatprep.subr.bf16.mxu0 0
          %450 = vmatpush1.bf16.xpose.msra.mxu0 0
          %451 = vmatprep.subr.bf16.mxu0 0
          %452 = vmatpush1.bf16.xpose.msra.mxu0 0
          %453 = vmatprep.subr.bf16.mxu0 0
          %454 = vmatpush1.bf16.xpose.msra.mxu0 0
          %455 = vmatprep.subr.bf16.mxu0 0
          %456 = vmatpush1.bf16.xpose.msra.mxu0 0
          %457 = vmatprep.subr.bf16.mxu0 0
          %458 = vmatpush1.bf16.xpose.msra.mxu0 0
          %459 = vmatprep.mubr.bf16.mxu0 0
          %460 = vmatmul.mubr.bf16.gmra.mrb[0].mxu0 %v413
          %v461 = vpop.f32.mrb[0].mxu0
          %v462 = vadd.f32 0.0, %v461
          %v463 = vpop.f32.mrb[0].mxu0
          %v464 = vpop.f32.mrb[0].mxu0
          %v465 = vadd.f32 0.0, %v464
          %v466 = vpop.f32.mrb[0].mxu0
          %467 = vdwg.mxu0
          %s468 = smul.addr %s402, 4
          %s469 = scalar_lea.vmem [#allocation13], %s468
          %v470 = vld [vmem:[%s469] sm:$0xf]
          %v471 = vld [vmem:[%s469 + $0x4] sm:$0xf]
          %v472 = vld [vmem:[%s469 + $0x8] sm:$0xf]
          %v473 = vld [vmem:[%s469 + $0xc] sm:$0xf]
          %v478 = vunpack.c.l.b16 %v470
          %v479 = vunpack.c.l.b16 %v471
          %v480 = vunpack.c.l.b16 %v472
          %v481 = vunpack.c.l.b16 %v473
          %v482 = vpack.c.b16 %v479, %v478
          %v483 = vpack.c.b16 %v481, %v480
          %486 = vmatprep.subr.bf16.mxu0 0
          %487 = vmatpush1.bf16.xpose.msra.mxu0 %v482
          %488 = vmatprep.subr.bf16.mxu0 0
          %489 = vmatpush1.bf16.xpose.msra.mxu0 %v483
          %490 = vmatprep.subr.bf16.mxu0 0
          %491 = vmatpush1.bf16.xpose.msra.mxu0 0
          %492 = vmatprep.subr.bf16.mxu0 0
          %493 = vmatpush1.bf16.xpose.msra.mxu0 0
          %494 = vmatprep.subr.bf16.mxu0 0
          %495 = vmatpush1.bf16.xpose.msra.mxu0 0
          %496 = vmatprep.subr.bf16.mxu0 0
          %497 = vmatpush1.bf16.xpose.msra.mxu0 0
          %498 = vmatprep.subr.bf16.mxu0 0
          %499 = vmatpush1.bf16.xpose.msra.mxu0 0
          %500 = vmatprep.subr.bf16.mxu0 0
          %501 = vmatpush1.bf16.xpose.msra.mxu0 0
          %502 = vmatprep.subr.bf16.mxu0 0
          %503 = vmatpush1.bf16.xpose.msra.mxu0 0
          %504 = vmatprep.subr.bf16.mxu0 0
          %505 = vmatpush1.bf16.xpose.msra.mxu0 0
          %506 = vmatprep.subr.bf16.mxu0 0
          %507 = vmatpush1.bf16.xpose.msra.mxu0 0
          %508 = vmatprep.subr.bf16.mxu0 0
          %509 = vmatpush1.bf16.xpose.msra.mxu0 0
          %510 = vmatprep.subr.bf16.mxu0 0
          %511 = vmatpush1.bf16.xpose.msra.mxu0 0
          %512 = vmatprep.subr.bf16.mxu0 0
          %513 = vmatpush1.bf16.xpose.msra.mxu0 0
          %514 = vmatprep.subr.bf16.mxu0 0
          %515 = vmatpush1.bf16.xpose.msra.mxu0 0
          %516 = vmatprep.subr.bf16.mxu0 0
          %517 = vmatpush1.bf16.xpose.msra.mxu0 0
          %518 = vmatprep.mubr.bf16.mxu0 0
          %519 = vmatmul.mubr.bf16.gmra.mrb[0].mxu0 %v413
          %v520 = vpop.f32.mrb[0].mxu0
          %v521 = vadd.f32 0.0, %v520
          %v522 = vpop.f32.mrb[0].mxu0
          %v523 = vpop.f32.mrb[0].mxu0
          %v524 = vadd.f32 0.0, %v523
          %v525 = vpop.f32.mrb[0].mxu0
          %526 = vdwg.mxu0
          %v527 = vpack.c.bf16 %v465, %v462
          %s528 = smul.addr %s35, 8
          %s529 = scalar_lea.vmem [#allocation3], %s528
          %vm530 = vcmask 261120
          %531 = vst.msk [vmem:[%s529] sm:$0xff] %vm530, %v527
          %v532 = vpack.c.bf16 %v524, %v521
          %s533 = smul.addr %s35, 8
          %s534 = scalar_lea.vmem [#allocation4], %s533
          %535 = vst.msk [vmem:[%s534] sm:$0xff] %vm530, %v532
        $region72: #{tpu_custom_call.1} parent=43 // pred_fallthru
          _
        %p536 = scmp.eq.s32.totalorder %s35, 0
        // Predicated region
        $region73: #{tpu_custom_call.1} parent=43 // pred_check
          %p537 = pneg %p536
        $region74: #{tpu_custom_call.1} parent=43 // pred_check_branch
          %539 = sbr.rel (%p537) target = $region76
        $region75: #{tpu_custom_call.1} parent=43 // pred_region
          %540 = vst [vmem:[#allocation2] sm:$0xff] 0.0
          %541 = vst [vmem:[#allocation2 + $0x8] sm:$0xff] 0.0
        $region76: #{tpu_custom_call.1} parent=43 // pred_fallthru
          _
        %v542 = vld [vmem:[%s334] sm:$0xf]
        %v543 = vld [vmem:[%s334 + $0x4] sm:$0xf]
        %s544 = smul.u32 %s35, 4
        %s545 = smul.addr %s544, 4
        %s546 = scalar_lea.vmem [#allocation10], %s545
        %v547 = vld [vmem:[%s546] sm:$0xf]
        %v548 = vld [vmem:[%s546 + $0x4] sm:$0xf]
        %v549 = vld [vmem:[%s546 + $0x8] sm:$0xf]
        %v550 = vld [vmem:[%s546 + $0xc] sm:$0xf]
        %v553 = vunpack.c.l.b16 %v542
        %v554 = vunpack.c.l.b16 %v543
        %v555 = vpack.c.b16 %v554, %v553
        %v561 = vunpack.c.l.b16 %v547
        %v562 = vunpack.c.l.b16 %v548
        %v563 = vunpack.c.l.b16 %v549
        %v564 = vunpack.c.l.b16 %v550
        %v565 = vpack.c.b16 %v562, %v561
        %v566 = vpack.c.b16 %v564, %v563
        %569 = vmatprep.subr.bf16.mxu0 0
        %570 = vmatpush1.bf16.xpose.msra.mxu0 %v565
        %571 = vmatprep.subr.bf16.mxu0 0
        %572 = vmatpush1.bf16.xpose.msra.mxu0 %v566
        %573 = vmatprep.subr.bf16.mxu0 0
        %574 = vmatpush1.bf16.xpose.msra.mxu0 0
        %575 = vmatprep.subr.bf16.mxu0 0
        %576 = vmatpush1.bf16.xpose.msra.mxu0 0
        %577 = vmatprep.subr.bf16.mxu0 0
        %578 = vmatpush1.bf16.xpose.msra.mxu0 0
        %579 = vmatprep.subr.bf16.mxu0 0
        %580 = vmatpush1.bf16.xpose.msra.mxu0 0
        %581 = vmatprep.subr.bf16.mxu0 0
        %582 = vmatpush1.bf16.xpose.msra.mxu0 0
        %583 = vmatprep.subr.bf16.mxu0 0
        %584 = vmatpush1.bf16.xpose.msra.mxu0 0
        %585 = vmatprep.subr.bf16.mxu0 0
        %586 = vmatpush1.bf16.xpose.msra.mxu0 0
        %587 = vmatprep.subr.bf16.mxu0 0
        %588 = vmatpush1.bf16.xpose.msra.mxu0 0
        %589 = vmatprep.subr.bf16.mxu0 0
        %590 = vmatpush1.bf16.xpose.msra.mxu0 0
        %591 = vmatprep.subr.bf16.mxu0 0
        %592 = vmatpush1.bf16.xpose.msra.mxu0 0
        %593 = vmatprep.subr.bf16.mxu0 0
        %594 = vmatpush1.bf16.xpose.msra.mxu0 0
        %595 = vmatprep.subr.bf16.mxu0 0
        %596 = vmatpush1.bf16.xpose.msra.mxu0 0
        %597 = vmatprep.subr.bf16.mxu0 0
        %598 = vmatpush1.bf16.xpose.msra.mxu0 0
        %599 = vmatprep.subr.bf16.mxu0 0
        %600 = vmatpush1.bf16.xpose.msra.mxu0 0
        %601 = vmatprep.mubr.bf16.mxu0 0
        %602 = vmatmul.mubr.bf16.gmra.mrb[0].mxu0 %v555
        %v603 = vpop.f32.mrb[0].mxu0
        %v604 = vadd.f32 0.0, %v603
        %v605 = vpop.f32.mrb[0].mxu0
        %v606 = vpop.f32.mrb[0].mxu0
        %v607 = vadd.f32 0.0, %v606
        %v608 = vpop.f32.mrb[0].mxu0
        %609 = vdwg.mxu0
        %v610 = vmul.f32 %v604, 0.17677669
        %v611 = vmul.f32 %v607, 0.17677669
        %v612 = vpack.c.bf16 %v611, %v610
        %s613 = smul.addr %s35, 8
        %s614 = scalar_lea.vmem [#allocation3], %s613
        %v615 = vld [vmem:[%s614] sm:$0xff]
        %s616 = smul.addr %s35, 8
        %s617 = scalar_lea.vmem [#allocation4], %s616
        %v618 = vld [vmem:[%s617] sm:$0xff]
        %vm619 = vcmask 261120
        %v621 = vsel %vm619, %v612, 0
        %v624 = vsel %vm619, %v615, 0
        %626 = vmatprep.subr.bf16.mxu0 0
        %627 = vmatpush1.bf16.xpose.msra.mxu0 %v624
        %628 = vmatprep.subr.bf16.mxu0 0
        %629 = vmatpush1.bf16.xpose.msra.mxu0 0
        %630 = vmatprep.subr.bf16.mxu0 0
        %631 = vmatpush1.bf16.xpose.msra.mxu0 0
        %632 = vmatprep.subr.bf16.mxu0 0
        %633 = vmatpush1.bf16.xpose.msra.mxu0 0
        %634 = vmatprep.subr.bf16.mxu0 0
        %635 = vmatpush1.bf16.xpose.msra.mxu0 0
        %636 = vmatprep.subr.bf16.mxu0 0
        %637 = vmatpush1.bf16.xpose.msra.mxu0 0
        %638 = vmatprep.subr.bf16.mxu0 0
        %639 = vmatpush1.bf16.xpose.msra.mxu0 0
        %640 = vmatprep.subr.bf16.mxu0 0
        %641 = vmatpush1.bf16.xpose.msra.mxu0 0
        %642 = vmatprep.subr.bf16.mxu0 0
        %643 = vmatpush1.bf16.xpose.msra.mxu0 0
        %644 = vmatprep.subr.bf16.mxu0 0
        %645 = vmatpush1.bf16.xpose.msra.mxu0 0
        %646 = vmatprep.subr.bf16.mxu0 0
        %647 = vmatpush1.bf16.xpose.msra.mxu0 0
        %648 = vmatprep.subr.bf16.mxu0 0
        %649 = vmatpush1.bf16.xpose.msra.mxu0 0
        %650 = vmatprep.subr.bf16.mxu0 0
        %651 = vmatpush1.bf16.xpose.msra.mxu0 0
        %652 = vmatprep.subr.bf16.mxu0 0
        %653 = vmatpush1.bf16.xpose.msra.mxu0 0
        %654 = vmatprep.subr.bf16.mxu0 0
        %655 = vmatpush1.bf16.xpose.msra.mxu0 0
        %656 = vmatprep.subr.bf16.mxu0 0
        %657 = vmatpush1.bf16.xpose.msra.mxu0 0
        %658 = vmatprep.mubr.bf16.mxu0 0
        %659 = vmatmul.mubr.bf16.gmra.mrb[0].mxu0 %v621
        %v660 = vpop.f32.mrb[0].mxu0
        %v661 = vadd.f32 0.0, %v660
        %v662 = vpop.f32.mrb[0].mxu0
        %v663 = vpop.f32.mrb[0].mxu0
        %v664 = vadd.f32 0.0, %v663
        %v665 = vpop.f32.mrb[0].mxu0
        %666 = vdwg.mxu0
        %vm667 = vcmask 130048
        %v668 = vsel %vm667, %v661, -inf
        %669 = vmax.xlane.f32.xlu0 %v668
        %v670 = vpop.xlane.xlu0 %669
        %v671 = vsel %vm667, %v664, -inf
        %672 = vmax.xlane.f32.xlu0 %v671
        %v673 = vpop.xlane.xlu0 %672
        %v674 = vsub.f32 %v661, %v670
        %v675 = vsub.f32 %v664, %v673
        %v676 = vmul.f32 %v674, 1.442695
        %v677 = vpow.pop %v676
        %v678 = vmul.f32 %v675, 1.442695
        %v679 = vpow.pop %v678
        %v680 = vsel %vm667, %v677, 0.0
        %681 = vadd.xlane.f32.xlu0 %v680
        %v682 = vpop.xlane.xlu0 %681
        %v683 = vsel %vm667, %v679, 0.0
        %684 = vadd.xlane.f32.xlu0 %v683
        %v685 = vpop.xlane.xlu0 %684
        %v686 = vpack.c.bf16 %v679, %v677
        %v688 = vsel %vm667, %v686, 0
        %690 = vmatprep.subr.bf16.mxu0 0
        %691 = vmatpush1.bf16.msra.mxu0 %v618
        %692 = vmatprep.subr.bf16.mxu0 0
        %693 = vmatpush1.bf16.msra.mxu0 0
        %694 = vmatprep.subr.bf16.mxu0 0
        %695 = vmatpush1.bf16.msra.mxu0 0
        %696 = vmatprep.subr.bf16.mxu0 0
        %697 = vmatpush1.bf16.msra.mxu0 0
        %698 = vmatprep.subr.bf16.mxu0 0
        %699 = vmatpush1.bf16.msra.mxu0 0
        %700 = vmatprep.subr.bf16.mxu0 0
        %701 = vmatpush1.bf16.msra.mxu0 0
        %702 = vmatprep.subr.bf16.mxu0 0
        %703 = vmatpush1.bf16.msra.mxu0 0
        %704 = vmatprep.subr.bf16.mxu0 0
        %705 = vmatpush1.bf16.msra.mxu0 0
        %706 = vmatprep.subr.bf16.mxu0 0
        %707 = vmatpush1.bf16.msra.mxu0 0
        %708 = vmatprep.subr.bf16.mxu0 0
        %709 = vmatpush1.bf16.msra.mxu0 0
        %710 = vmatprep.subr.bf16.mxu0 0
        %711 = vmatpush1.bf16.msra.mxu0 0
        %712 = vmatprep.subr.bf16.mxu0 0
        %713 = vmatpush1.bf16.msra.mxu0 0
        %714 = vmatprep.subr.bf16.mxu0 0
        %715 = vmatpush1.bf16.msra.mxu0 0
        %716 = vmatprep.subr.bf16.mxu0 0
        %717 = vmatpush1.bf16.msra.mxu0 0
        %718 = vmatprep.subr.bf16.mxu0 0
        %719 = vmatpush1.bf16.msra.mxu0 0
        %720 = vmatprep.subr.bf16.mxu0 0
        %721 = vmatpush1.bf16.msra.mxu0 0
        %722 = vmatprep.mubr.bf16.mxu0 0
        %723 = vmatmul.mubr.bf16.gmra.mrb[0].mxu0 %v688
        %v724 = vpop.f32.mrb[0].mxu0
        %v725 = vadd.f32 0.0, %v724
        %v726 = vpop.f32.mrb[0].mxu0
        %v727 = vpop.f32.mrb[0].mxu0
        %v728 = vadd.f32 0.0, %v727
        %v729 = vpop.f32.mrb[0].mxu0
        %730 = vdwg.mxu0
        %v731 = vrcp.pop %v682
        %v732 = vrcp.pop %v685
        %v733 = vmul.f32 %v725, %v731
        %v734 = vmul.f32 %v728, %v732
        %v735 = vld [vmem:[#allocation2] sm:$0xff]
        %v736 = vld [vmem:[#allocation2 + $0x8] sm:$0xff]
        %v737 = vpack.c.bf16 %v734, %v733
        %s738 = smul.addr %s544, 4
        %s739 = scalar_lea.vmem [#allocation14], %s738
        %v740 = vld [vmem:[%s739] sm:$0xf]
        %v741 = vld [vmem:[%s739 + $0x4] sm:$0xf]
        %v742 = vld [vmem:[%s739 + $0x8] sm:$0xf]
        %v743 = vld [vmem:[%s739 + $0xc] sm:$0xf]
        %v748 = vunpack.c.l.b16 %v740
        %v749 = vunpack.c.l.b16 %v741
        %v750 = vunpack.c.l.b16 %v742
        %v751 = vunpack.c.l.b16 %v743
        %v752 = vpack.c.b16 %v749, %v748
        %v753 = vpack.c.b16 %v751, %v750
        %v757 = vsel %vm619, %v737, 0
        %759 = vmatprep.subr.bf16.mxu0 0
        %760 = vmatpush1.bf16.msra.mxu0 %v752
        %761 = vmatprep.subr.bf16.mxu0 0
        %762 = vmatpush1.bf16.msra.mxu0 %v753
        %763 = vmatprep.subr.bf16.mxu0 0
        %764 = vmatpush1.bf16.msra.mxu0 0
        %765 = vmatprep.subr.bf16.mxu0 0
        %766 = vmatpush1.bf16.msra.mxu0 0
        %767 = vmatprep.subr.bf16.mxu0 0
        %768 = vmatpush1.bf16.msra.mxu0 0
        %769 = vmatprep.subr.bf16.mxu0 0
        %770 = vmatpush1.bf16.msra.mxu0 0
        %771 = vmatprep.subr.bf16.mxu0 0
        %772 = vmatpush1.bf16.msra.mxu0 0
        %773 = vmatprep.subr.bf16.mxu0 0
        %774 = vmatpush1.bf16.msra.mxu0 0
        %775 = vmatprep.subr.bf16.mxu0 0
        %776 = vmatpush1.bf16.msra.mxu0 0
        %777 = vmatprep.subr.bf16.mxu0 0
        %778 = vmatpush1.bf16.msra.mxu0 0
        %779 = vmatprep.subr.bf16.mxu0 0
        %780 = vmatpush1.bf16.msra.mxu0 0
        %781 = vmatprep.subr.bf16.mxu0 0
        %782 = vmatpush1.bf16.msra.mxu0 0
        %783 = vmatprep.subr.bf16.mxu0 0
        %784 = vmatpush1.bf16.msra.mxu0 0
        %785 = vmatprep.subr.bf16.mxu0 0
        %786 = vmatpush1.bf16.msra.mxu0 0
        %787 = vmatprep.subr.bf16.mxu0 0
        %788 = vmatpush1.bf16.msra.mxu0 0
        %789 = vmatprep.subr.bf16.mxu0 0
        %790 = vmatpush1.bf16.msra.mxu0 0
        %791 = vmatprep.mubr.bf16.mxu0 0
        %792 = vmatmul.mubr.bf16.gmra.mrb[0].mxu0 %v757
        %v793 = vpop.f32.mrb[0].mxu0
        %v794 = vadd.f32 0.0, %v793
        %v795 = vpop.f32.mrb[0].mxu0
        %v796 = vpop.f32.mrb[0].mxu0
        %v797 = vadd.f32 0.0, %v796
        %v798 = vpop.f32.mrb[0].mxu0
        %799 = vdwg.mxu0
        %v800 = vadd.f32 %v735, %v794
        %v801 = vadd.f32 %v736, %v797
        %802 = vst [vmem:[#allocation2] sm:$0xff] %v800
        %803 = vst [vmem:[#allocation2 + $0x8] sm:$0xff] %v801
        %p804 = scmp.eq.s32.totalorder %s35, 3
        // Predicated region
        $region77: #{tpu_custom_call.1} parent=43 // pred_check
          %p805 = pneg %p804
        $region78: #{tpu_custom_call.1} parent=43 // pred_check_branch
          %807 = sbr.rel (%p805) target = $region80
        $region79: #{tpu_custom_call.1} parent=43 // pred_region
          %v808 = vld [vmem:[#allocation2] sm:$0xff]
          %v809 = vld [vmem:[#allocation2 + $0x8] sm:$0xff]
          %810 = vst [vmem:[%s392] sm:$0xff] %v808
          %811 = vst [vmem:[%s392 + $0x8] sm:$0xff] %v809
        $region80: #{tpu_custom_call.1} parent=43 // pred_fallthru
          _
        %s812 = sand.u32 %s195, 1
        %s813 = scalar_lea.sflag [#allocation7], %s812
        %s814 = sand.u32 %s195, 1
        %s815 = smul.addr %s814, 16
        %s816 = scalar_lea.vmem [#allocation16], %s815
        // Predicated region
        $region81: #{tpu_custom_call.1} parent=43 // pred_check
          %p817 = pneg %p205
        $region82: #{tpu_custom_call.1} parent=43 // pred_check_branch
          %819 = sbr.rel (%p817) target = $region84
        $region83: #{tpu_custom_call.1} parent=43 // pred_region
          %s820 = smul.u32 2, %s34
          %s822 = ssub.s32 256, 256
          %823 = vsyncadd %s813, %s822
          %s824 = smul.addr %s33, 2
          %s825 = sadd.s32 %s820, %s824
          %s826 = smul.addr %s825, 128
          %s827 = scalar_lea.hbm %s6, %s826
          %s828 = sshll.u32 %s816, 4
          %s829 = int_to_ptr.vmem [resolvable:$true] %s828
          %834 = dma.vmem_to_hbm [thread:$0]  %s829, 256, %s827, %s813, 128, 128, 8
        $region84: #{tpu_custom_call.1} parent=43 // pred_fallthru
          _
      $region44: #{tpu_custom_call.1} parent=5 // pred_fallthru
        _
      %p835 = scmp.le.s32.totalorder 2, %s23
      // Predicated region
      $region85: #{tpu_custom_call.1} parent=5 // pred_check
        %p836 = pneg %p835
      $region86: #{tpu_custom_call.1} parent=5 // pred_check_branch
        %838 = sbr.rel (%p836) target = $region88
      $region87: #{tpu_custom_call.1} parent=5 // pred_region
        %s839 = ssub.s32 %s23, 2
        // Predicated region
        $region89: #{tpu_custom_call.1} parent=87 // pred_check
          %p840 = pneg %p211
        $region90: #{tpu_custom_call.1} parent=87 // pred_check_branch
          %842 = sbr.rel (%p840) target = $region92
        $region91: #{tpu_custom_call.1} parent=87 // pred_region
          %s843 = sand.u32 %s196, 1
          %s844 = scalar_lea.sflag [#allocation7], %s843
          %s845 = sand.u32 %s196, 1
          %s846 = smul.addr %s845, 16
          %s847 = scalar_lea.vmem [#allocation16], %s846
          %848 = dma.done %s844, 256
        $region92: #{tpu_custom_call.1} parent=87 // pred_fallthru
          _
      $region88: #{tpu_custom_call.1} parent=5 // pred_fallthru
        _
    $region6: #{tpu_custom_call.1} parent=1 // loop_footer
      %s27 = sadd.s32 1, %s23
    $region7: #{tpu_custom_call.1} parent=1 // loop_footer_branch
      %22 = sbr.rel target = $region3
    $region8: #{tpu_custom_call.1} parent=1 // loop_exit
      _
    %849 = vsyncpa [#allocation6], 1
    %s850 = scalar_lea.sflag [#allocation6], 1
    %851 = vsyncpa %s850, 1
    %852 = vsyncpa [#allocation9], 1
    %s853 = scalar_lea.sflag [#allocation9], 1
    %854 = vsyncpa %s853, 1
    %855 = vsyncpa [#allocation12], 1
    %856 = vsyncpa [#allocation15], 1
    %857 = vsyncpa [#allocation7], 1
    %s858 = scalar_lea.sflag [#allocation7], 1
    %859 = vsyncpa %s858, 1

</llo_original>
